<compile_context>
chip_gen: v6e
topology: v6e:2x2x1
jax: 0.10.0
libtpu: 0.0.40
codegen_flags: <defaults>
</compile_context>

<pallas_src>
import functools

import jax
import jax.numpy as jnp
from jax import lax
from jax.experimental import pallas as pl
from jax.experimental.pallas import tpu as pltpu

EPS = 1e-5


# --------------------- kernel A: ConvTranspose2d(2,2) + BN + ReLU ---------------------
def _upconv_kernel(x_ref, w_ref, sh_ref, o_ref):
    # x_ref: (TM, Cin)  w_ref: (Cin, 4*Cout)  sh_ref: (1, 4*Cout)  o_ref: (TM, 4*Cout)
    y = jnp.dot(x_ref[...], w_ref[...], preferred_element_type=jnp.float32)
    y = y + sh_ref[...].astype(jnp.float32)
    o_ref[...] = jnp.maximum(y, 0.0).astype(o_ref.dtype)


def _upconv_bn_relu(x_tok, w, sh):
    """relu((x_tok @ w) + shift); BN scale is pre-folded into w."""
    M, K = x_tok.shape
    N = w.shape[1]
    tm = min(512, M)
    # keep >=2 grid points when possible so both v7x TensorCores get work
    if M >= 16 and M // tm < 2:
        tm = max(8, ((M // 2) // 8) * 8)
    if tm % 8 != 0:
        tm = M  # fall back to a single full block (always legal)
    return pl.pallas_call(
        _upconv_kernel,
        out_shape=jax.ShapeDtypeStruct((M, N), x_tok.dtype),
        grid=(pl.cdiv(M, tm),),           # ragged tail handled by Pallas (no explicit jnp.pad)
        in_specs=[
            pl.BlockSpec((tm, K), lambda i: (i, 0)),
            pl.BlockSpec((K, N), lambda i: (0, 0)),
            pl.BlockSpec((1, N), lambda i: (0, 0)),
        ],
        out_specs=pl.BlockSpec((tm, N), lambda i: (i, 0)),
        compiler_params=pltpu.CompilerParams(dimension_semantics=("parallel",)),
    )(x_tok, w, sh)


# --------------------------- kernel B: fused DoubleConv --------------------------------
def _double_conv_kernel(Hc, Wc, c_ref, u_ref, w1c_ref, w1u_ref, w2_ref,
                        sh1_ref, sh2_ref, o_ref, hpad_ref):
    # Flat spatial layout: padded frame is (Hc+3, Wc+2); flat index = r*(Wc+2) + s.
    # Output tokens t = p*(Wc+2) + q with q < Wc valid (2 "junk" slots per flat row).
    # A 3x3 tap (dy, dx) is then one contiguous slice at static offset dy*(Wc+2) + dx.
    Wp = Wc + 2
    LA = Hc * Wp
    f32 = jnp.float32
    Cm = sh1_ref.shape[-1]
    Co = sh2_ref.shape[-1]

    cp = c_ref[0]            # (FLATP, Cc)   zero-haloed concat_x, flattened
    up = u_ref[0]            # (FLATP, Cout) zero-haloed + F.pad-placed upsample branch

    # ---- conv1: in-kernel im2col (9 shifted taps), concat folded into split weights ----
    acc = jnp.zeros((LA, Cm), f32)
    for t in range(9):
        off = (t // 3) * Wp + (t % 3)
        acc = acc + jnp.dot(cp[off:off + LA, :], w1c_ref[t],
                            preferred_element_type=f32)
        acc = acc + jnp.dot(up[off:off + LA, :], w1u_ref[t],
                            preferred_element_type=f32)
    h = jnp.maximum(acc + sh1_ref[...].astype(f32), 0.0)
    # zero the junk tokens (they land exactly on halo slots of the staging buffer below)
    col = lax.broadcasted_iota(jnp.int32, (LA, 1), 0) % Wp
    h = jnp.where(col < Wc, h, 0.0)

    # ---- stage conv1 output into a zero-haloed flat VMEM buffer (stays on-chip) ----
    hpad_ref[...] = jnp.zeros(hpad_ref.shape, hpad_ref.dtype)
    hpad_ref[pl.ds(Wp + 1, LA), :] = h

    # ---- conv2: same shifted-tap scheme, epilogue BN + ReLU, single store ----
    hp = hpad_ref[...]
    acc2 = jnp.zeros((LA, Co), f32)
    for t in range(9):
        off = (t // 3) * Wp + (t % 3)
        acc2 = acc2 + jnp.dot(hp[off:off + LA, :], w2_ref[t],
                              preferred_element_type=f32)
    out = jnp.maximum(acc2 + sh2_ref[...].astype(f32), 0.0)
    o_ref[0] = out.astype(o_ref.dtype)


def _double_conv(c_flat, up_flat, p, Hc, Wc):
    B, FLATP, Cc = c_flat.shape
    Cu = up_flat.shape[-1]
    Cm = p['w1c'].shape[-1]
    Co = p['w2'].shape[-1]
    Wp = Wc + 2
    LA = Hc * Wp
    dt = c_flat.dtype
    kern = functools.partial(_double_conv_kernel, Hc, Wc)
    return pl.pallas_call(
        kern,
        out_shape=jax.ShapeDtypeStruct((B, LA, Co), dt),
        grid=(B,),
        in_specs=[
            pl.BlockSpec((1, FLATP, Cc), lambda b: (b, 0, 0)),
            pl.BlockSpec((1, FLATP, Cu), lambda b: (b, 0, 0)),
            pl.BlockSpec((9, Cc, Cm), lambda b: (0, 0, 0)),
            pl.BlockSpec((9, Cu, Cm), lambda b: (0, 0, 0)),
            pl.BlockSpec((9, Cm, Co), lambda b: (0, 0, 0)),
            pl.BlockSpec((1, Cm), lambda b: (0, 0)),
            pl.BlockSpec((1, Co), lambda b: (0, 0)),
        ],
        out_specs=pl.BlockSpec((1, LA, Co), lambda b: (b, 0, 0)),
        scratch_shapes=[pltpu.VMEM((FLATP, Cm), jnp.float32)],
        compiler_params=pltpu.CompilerParams(dimension_semantics=("parallel",)),
    )(c_flat, up_flat,
      p['w1c'].astype(dt), p['w1u'].astype(dt), p['w2'].astype(dt),
      p['sh1'], p['sh2'])


# ------------------------------- module forward -----------------------------------------
def upscaling_forward(p, x_nchw, concat_nchw):
    Cout = p['out_channels']
    x = jnp.transpose(x_nchw, (0, 2, 3, 1))        # (B, H, W, Cin)   NHWC
    c = jnp.transpose(concat_nchw, (0, 2, 3, 1))   # (B, Hc, Wc, Cc)  NHWC
    B, H, W, Cin = x.shape
    _, Hc, Wc, Cc = c.shape
    dt = x.dtype

    # --- stage 1: ConvTranspose2d(2,2) + BN + ReLU (fused matmul kernel A) ---
    yt = _upconv_bn_relu(x.reshape(B * H * W, Cin), p['wt_flat'].astype(dt), p['sh_t'])
    # space-to-depth unpack of the 4 sub-pixel planes (one small XLA layout pass)
    up = yt.reshape(B, H, W, 2, 2, Cout).transpose(0, 1, 3, 2, 4, 5).reshape(
        B, 2 * H, 2 * W, Cout)

    # One pad per tensor: replicate the module's F.pad argument order exactly (incl. its
    # use of Y for the W-left pad), fold in the 3x3 conv halo (+1 on every side), and add
    # one extra bottom halo row so shifted tap reads of the trailing junk tokens stay
    # in-bounds (replaces the previous separate flat tail pad).
    Y = Hc - 2 * H
    X = Wc - 2 * W
    up_flat = jnp.pad(up, ((0, 0),
                           (Y // 2 + 1, (Y - Y // 2) + 2),
                           (Y // 2 + 1, (X - X // 2) + 1),
                           (0, 0))).reshape(B, -1, Cout)       # (B, (Hc+3)*(Wc+2), Cout)
    c_flat = jnp.pad(c, ((0, 0), (1, 2), (1, 1), (0, 0))).reshape(B, -1, Cc)

    # --- stage 2: DoubleConv, fully fused in one kernel (pad+concat+conv1+conv2) ---
    out_flat = _double_conv(c_flat, up_flat, p, Hc, Wc)        # (B, Hc*(Wc+2), Cout)
    out = out_flat.reshape(B, Hc, Wc + 2, Cout)[:, :, :Wc, :]  # drop junk columns
    return jnp.transpose(out, (0, 3, 1, 2))                    # back to NCHW


# ----------------------------------- params ---------------------------------------------
def _fold_bn(gamma, beta, mean, var, conv_bias):
    scale = gamma / jnp.sqrt(var + EPS)
    shift = beta + scale * (conv_bias - mean)
    return scale, shift


def init_params(key, in_channels, out_channels):
    ks = list(jax.random.split(key, 9))

    def n(shape, k, s=0.1):
        return s * jax.random.normal(k, shape, jnp.float32)

    def bn(k):
        k1, k2, k3, k4 = jax.random.split(k, 4)
        gamma = 1.0 + 0.1 * jax.random.normal(k1, (out_channels,), jnp.float32)
        beta = 0.1 * jax.random.normal(k2, (out_channels,), jnp.float32)
        mean = 0.1 * jax.random.normal(k3, (out_channels,), jnp.float32)
        var = 0.5 + jnp.abs(jax.random.normal(k4, (out_channels,), jnp.float32))
        return gamma, beta, mean, var

    raw = {
        'wt': n((in_channels, out_channels, 2, 2), ks[0]),   # ConvTranspose2d (Cin,Cout,kH,kW)
        'bt': n((out_channels,), ks[1]),
        'bn_t': bn(ks[2]),
        'w1': n((out_channels, in_channels, 3, 3), ks[3]),   # Conv2d OIHW
        'b1': n((out_channels,), ks[4]),
        'bn1': bn(ks[5]),
        'w2': n((out_channels, out_channels, 3, 3), ks[6]),
        'b2': n((out_channels,), ks[7]),
        'bn2': bn(ks[8]),
    }

    cc = in_channels - out_channels          # channels contributed by concat_x
    p = {'out_channels': out_channels}

    # ConvTranspose: fold BN scale into weight columns; (Cin,Cout,2,2) -> (Cin, (ki,kj,co))
    sc_t, sh_t = _fold_bn(*raw['bn_t'], raw['bt'])
    wt_s = raw['wt'] * sc_t[None, :, None, None]
    p['wt_flat'] = wt_s.transpose(0, 2, 3, 1).reshape(in_channels, 4 * out_channels)
    p['sh_t'] = jnp.tile(sh_t, 4)[None, :]                    # (1, 4*Cout)

    # conv1: OIHW -> (ky,kx,ci,co), split ci into (concat_x part, up part), scale folded
    sc1, sh1 = _fold_bn(*raw['bn1'], raw['b1'])
    w1_t = (raw['w1'] * sc1[:, None, None, None]).transpose(2, 3, 1, 0)   # (3,3,Ccat,Cm)
    p['w1c'] = w1_t[:, :, :cc, :].reshape(9, cc, out_channels)
    p['w1u'] = w1_t[:, :, cc:, :].reshape(9, out_channels, out_channels)
    p['sh1'] = sh1[None, :]                                   # (1, Cm)

    # conv2
    sc2, sh2 = _fold_bn(*raw['bn2'], raw['b2'])
    p['w2'] = (raw['w2'] * sc2[:, None, None, None]).transpose(2, 3, 1, 0).reshape(
        9, out_channels, out_channels)
    p['sh2'] = sh2[None, :]                                   # (1, Co)
    return raw, p


# ------------------------------ pure-JAX reference --------------------------------------
def ref_forward(raw, x_nchw, c_nchw, out_channels):
    def bn_relu(x, bn):
        gamma, beta, mean, var = bn
        return jnp.maximum(gamma * (x - mean) / jnp.sqrt(var + EPS) + beta, 0.0)

    x = jnp.transpose(x_nchw, (0, 2, 3, 1)).astype(jnp.float32)
    c = jnp.transpose(c_nchw, (0, 2, 3, 1)).astype(jnp.float32)
    B, H, W, _ = x.shape
    up = jnp.einsum('bhwi,iokl->bhkwlo', x, raw['wt']).reshape(B, 2 * H, 2 * W, out_channels)
    up = bn_relu(up + raw['bt'], raw['bn_t'])
    Y = c.shape[1] - up.shape[1]
    X = c.shape[2] - up.shape[2]
    up = jnp.pad(up, ((0, 0), (Y // 2, Y - Y // 2), (Y // 2, X - X // 2), (0, 0)))
    cat = jnp.concatenate([c, up], axis=-1)

    def conv(a, w_oihw, b):
        w = jnp.transpose(w_oihw, (2, 3, 1, 0))  # HWIO
        return jax.lax.conv_general_dilated(
            a, w, (1, 1), 'SAME', dimension_numbers=('NHWC', 'HWIO', 'NHWC')) + b

    h = bn_relu(conv(cat, raw['w1'], raw['b1']), raw['bn1'])
    o = bn_relu(conv(h, raw['w2'], raw['b2']), raw['bn2'])
    return jnp.transpose(o, (0, 3, 1, 2))


# ---------------------------------------- main ------------------------------------------
if __name__ == "__main__":
    key = jax.random.PRNGKey(0)
    in_channels, out_channels = 8, 4
    B, H, W = 2, 8, 8
    k1, k2, k3 = jax.random.split(key, 3)
    x = jax.random.normal(k1, (B, in_channels, H, W), jnp.float32)
    concat_x = jax.random.normal(
        k2, (B, in_channels - out_channels, 2 * H, 2 * W), jnp.float32)

    raw, params = init_params(k3, in_channels, out_channels)

    out = upscaling_forward(params, x, concat_x)
    out = jax.block_until_ready(out)

    ref = ref_forward(raw, x, concat_x, out_channels)
    assert out.shape == (B, out_channels, 2 * H, 2 * W), out.shape
    err = float(jnp.max(jnp.abs(out - ref)))
    assert jnp.allclose(out, ref, atol=2e-4, rtol=2e-4), err
    print("KERNEL_OK")
</pallas_src>

<mosaic_0001>
module attributes {stable_mosaic.version = 11 : i64} {
  func.func @_upconv_kernel(%arg0: i32, %arg1: memref<64x8xf32, #tpu.memory_space<vmem>>, %arg2: memref<8x16xf32, #tpu.memory_space<vmem>>, %arg3: memref<1x16xf32, #tpu.memory_space<vmem>>, %arg4: memref<64x16xf32, #tpu.memory_space<vmem>>) attributes {dimension_semantics = [#tpu.dimension_semantics<parallel>], iteration_bounds = array<i64: 2>, scalar_prefetch = 0 : i64, scratch_operands = 0 : i64, tpu.core_type = #tpu.core_type<tc>, window_params = [{transform_indices = @transform_0, window_bounds = array<i64: 64, 8>}, {pipeline_mode = #tpu.pipeline_mode<synchronous>, transform_indices = @transform_1, window_bounds = array<i64: 8, 16>}, {pipeline_mode = #tpu.pipeline_mode<synchronous>, transform_indices = @transform_2, window_bounds = array<i64: 1, 16>}, {transform_indices = @transform_3, window_bounds = array<i64: 64, 16>}]} {
    %c0 = arith.constant 0 : index
    %c0_0 = arith.constant 0 : index
    %0 = vector.load %arg1[%c0, %c0_0] : memref<64x8xf32, #tpu.memory_space<vmem>>, vector<64x8xf32>
    %c0_1 = arith.constant 0 : index
    %c0_2 = arith.constant 0 : index
    %1 = vector.load %arg2[%c0_1, %c0_2] : memref<8x16xf32, #tpu.memory_space<vmem>>, vector<8x16xf32>
    %cst = arith.constant dense<0.000000e+00> : vector<64x16xf32>
    %2 = tpu.matmul %0, %1, %cst {dimension_numbers = #tpu.dot_dimension_numbers<[1], [0], [0], [1], [0, 0, 1, 1], [], []>} : vector<64x8xf32>, vector<8x16xf32>, vector<64x16xf32> -> vector<64x16xf32>
    %c0_3 = arith.constant 0 : index
    %c0_4 = arith.constant 0 : index
    %3 = vector.load %arg3[%c0_3, %c0_4] : memref<1x16xf32, #tpu.memory_space<vmem>>, vector<1x16xf32>
    %4 = vector.broadcast %3 : vector<1x16xf32> to vector<64x16xf32>
    %5 = arith.addf %2, %4 : vector<64x16xf32>
    %cst_5 = arith.constant 0.000000e+00 : f32
    %6 = vector.broadcast %cst_5 : f32 to vector<64x16xf32>
    %7 = arith.maximumf %5, %6 : vector<64x16xf32>
    %c0_6 = arith.constant 0 : index
    %c0_7 = arith.constant 0 : index
    %8 = vector.load %arg4[%c0_6, %c0_7] : memref<64x16xf32, #tpu.memory_space<vmem>>, vector<64x16xf32>
    tpu.vector_store %arg4[%c0_6, %c0_7], %7 {strides = array<i32>} : memref<64x16xf32, #tpu.memory_space<vmem>>, vector<64x16xf32>,
    return
  }
  func.func @transform_0(%arg0: i32) -> (i32, i32) {
    %c0_i32 = arith.constant 0 : i32
    %c0_i32_0 = arith.constant 0 : i32
    return %arg0, %c0_i32 : i32, i32
  }
  func.func @transform_1(%arg0: i32) -> (i32, i32) {
    %c0_i32 = arith.constant 0 : i32
    %c0_i32_0 = arith.constant 0 : i32
    %c0_i32_1 = arith.constant 0 : i32
    return %c0_i32, %c0_i32_0 : i32, i32
  }
  func.func @transform_2(%arg0: i32) -> (i32, i32) {
    %c0_i32 = arith.constant 0 : i32
    %c0_i32_0 = arith.constant 0 : i32
    %c0_i32_1 = arith.constant 0 : i32
    return %c0_i32, %c0_i32_0 : i32, i32
  }
  func.func @transform_3(%arg0: i32) -> (i32, i32) {
    %c0_i32 = arith.constant 0 : i32
    %c0_i32_0 = arith.constant 0 : i32
    return %arg0, %c0_i32 : i32, i32
  }
}

</mosaic_0001>

<llo_original>
// kernel: tpu_custom_call.1
$region0: #{tpu_custom_call.1}
  #allocation0 [shape = 'u32[]', space=smem, size = 0x4, offset = 0x4, fixed_abs, tag = 'smem constant byte address 0x4 - core index']
  #allocation1 [shape = 'u32[144,128]{1,0:T(1,128)}', space=vmem, size = 0x12000, scoped, tag = 'internal scratch']
  %s0 = inlined_call_operand.vmem [shape: f32[128,8], index: 0, kind: input, shape index: {}]
  %s1 = inlined_call_operand.vmem [shape: f32[8,16], index: 1, kind: input, shape index: {}]
  %s2 = inlined_call_operand.vmem [shape: f32[1,16], index: 2, kind: input, shape index: {}]
  %s3 = inlined_call_operand.vmem [shape: f32[128,16], index: 3, kind: output, shape index: {}]
  %s4 = sld [smem:[#allocation0]]
  $region45: #{tpu_custom_call.1} parent=0
    _
  %s6 = ssub.s32 1, %s4
  %s7 = scalar_select 0, %s6, %s4
  loop: start=0, step=1, limit=4
  $region2: #{tpu_custom_call.1} parent=0 // loop_pre_header
    _
  $region3: #{tpu_custom_call.1} parent=0 // loop_header
    %s9 = sphi 0, %s13
    %p10 = scmp.ge.s32.totalorder %s9, 4
    %s19 = sphi 0, %s21
    %s22 = sphi 0, %s19
    %s23 = sphi 0, %s22
    %s39 = sphi 0, %s23
    %s43 = sphi 0, %s43
    %s45 = sphi 0, %s43
    %s46 = sphi 0, %s45
    %s60 = sphi 0, %s46
    %s64 = sphi 0, %s64
    %s66 = sphi 0, %s64
    %s67 = sphi 0, %s66
    %s81 = sphi 0, %s67
    %s87 = sphi 0, %s89
    %s90 = sphi 0, %s87
    %s91 = sphi 0, %s90
    %s107 = sphi 0, %s91
  $region4: #{tpu_custom_call.1} parent=0 // loop_header_branch
    %12 = sbr.rel (%p10) target = $region8
  $region5: #{tpu_custom_call.1} parent=0 // loop_body
    %s14 = ssub.s32 %s9, 1
    %s15 = ssub.s32 %s9, 2
    %s16 = sadd.s32 %s9, 1
    %s17 = ssub.s32 %s9, %s16
    %p18 = scmp.eq.s32.totalorder %s17, 0
    %s20 = sadd.s32 %s19, 1
    %s21 = scalar_select %p18, %s19, %s20
    %p24 = pneg %p18
    %p25 = scmp.eq.s32.totalorder %s9, 1
    %p26 = por %p24, %p25
    %p27 = scmp.ne.s32.totalorder %s19, %s22
    %p28 = scmp.eq.s32.totalorder %s9, 0
    %p29 = por %p27, %p28
    %p30 = scmp.ne.s32.totalorder %s19, %s22
    %p31 = scmp.eq.s32.totalorder %s14, 1
    %p32 = por %p30, %p31
    %p33 = scmp.ne.s32.totalorder %s22, %s23
    %p34 = scmp.eq.s32.totalorder %s14, 0
    %p35 = por %p33, %p34
    %p36 = scmp.ne.s32.totalorder %s22, %s23
    %p37 = scmp.eq.s32.totalorder %s15, 1
    %p38 = por %p36, %p37
    %p40 = scmp.ne.s32.totalorder %s23, %s39
    %p41 = scmp.eq.s32.totalorder %s15, 0
    %p42 = por %p40, %p41
    %s44 = sadd.s32 %s43, 1
    %p47 = scmp.eq.s32.totalorder %s9, 1
    %p48 = scmp.ne.s32.totalorder %s43, %s45
    %p49 = scmp.eq.s32.totalorder %s9, 0
    %p50 = por %p48, %p49
    %p51 = scmp.ne.s32.totalorder %s43, %s45
    %p52 = scmp.eq.s32.totalorder %s14, 1
    %p53 = por %p51, %p52
    %p54 = scmp.ne.s32.totalorder %s45, %s46
    %p55 = scmp.eq.s32.totalorder %s14, 0
    %p56 = por %p54, %p55
    %p57 = scmp.ne.s32.totalorder %s45, %s46
    %p58 = scmp.eq.s32.totalorder %s15, 1
    %p59 = por %p57, %p58
    %p61 = scmp.ne.s32.totalorder %s46, %s60
    %p62 = scmp.eq.s32.totalorder %s15, 0
    %p63 = por %p61, %p62
    %s65 = sadd.s32 %s64, 1
    %p68 = scmp.eq.s32.totalorder %s9, 1
    %p69 = scmp.ne.s32.totalorder %s64, %s66
    %p70 = scmp.eq.s32.totalorder %s9, 0
    %p71 = por %p69, %p70
    %p72 = scmp.ne.s32.totalorder %s64, %s66
    %p73 = scmp.eq.s32.totalorder %s14, 1
    %p74 = por %p72, %p73
    %p75 = scmp.ne.s32.totalorder %s66, %s67
    %p76 = scmp.eq.s32.totalorder %s14, 0
    %p77 = por %p75, %p76
    %p78 = scmp.ne.s32.totalorder %s66, %s67
    %p79 = scmp.eq.s32.totalorder %s15, 1
    %p80 = por %p78, %p79
    %p82 = scmp.ne.s32.totalorder %s67, %s81
    %p83 = scmp.eq.s32.totalorder %s15, 0
    %p84 = por %p82, %p83
    %s85 = ssub.s32 %s9, %s16
    %p86 = scmp.eq.s32.totalorder %s85, 0
    %s88 = sadd.s32 %s87, 1
    %s89 = scalar_select %p86, %s87, %s88
    %p92 = pneg %p86
    %p93 = scmp.eq.s32.totalorder %s9, 1
    %p94 = por %p92, %p93
    %p95 = scmp.ne.s32.totalorder %s87, %s90
    %p96 = scmp.eq.s32.totalorder %s9, 0
    %p97 = por %p95, %p96
    %p98 = scmp.ne.s32.totalorder %s87, %s90
    %p99 = scmp.eq.s32.totalorder %s14, 1
    %p100 = por %p98, %p99
    %p101 = scmp.ne.s32.totalorder %s90, %s91
    %p102 = scmp.eq.s32.totalorder %s14, 0
    %p103 = por %p101, %p102
    %p104 = scmp.ne.s32.totalorder %s90, %s91
    %p105 = scmp.eq.s32.totalorder %s15, 1
    %p106 = por %p104, %p105
    %p108 = scmp.ne.s32.totalorder %s91, %s107
    %p109 = scmp.eq.s32.totalorder %s15, 0
    %p110 = por %p108, %p109
    %p111 = scmp.le.s32.totalorder 1, %s9
    %p112 = scmp.lt.s32.totalorder %s9, 3
    %p113 = pnand %p111, %p112
    %p114 = pneg %p113
    // Predicated region
    $region9: #{tpu_custom_call.1} parent=5 // pred_check
      _
    $region10: #{tpu_custom_call.1} parent=5 // pred_check_branch
      %116 = sbr.rel (%p113) target = $region12
    $region11: #{tpu_custom_call.1} parent=5 // pred_region
      %s117 = ssub.s32 %s9, 1
      // Predicated region
      $region13: #{tpu_custom_call.1} parent=11 // pred_check
        %p118 = pneg %p56
      $region14: #{tpu_custom_call.1} parent=11 // pred_check_branch
        %120 = sbr.rel (%p118) target = $region16
      $region15: #{tpu_custom_call.1} parent=11 // pred_region
        _
      $region16: #{tpu_custom_call.1} parent=11 // pred_fallthru
        _
      // Predicated region
      $region17: #{tpu_custom_call.1} parent=11 // pred_check
        %p121 = pneg %p77
      $region18: #{tpu_custom_call.1} parent=11 // pred_check_branch
        %123 = sbr.rel (%p121) target = $region20
      $region19: #{tpu_custom_call.1} parent=11 // pred_region
        _
      $region20: #{tpu_custom_call.1} parent=11 // pred_fallthru
        _
    $region12: #{tpu_custom_call.1} parent=5 // pred_fallthru
      _
    %p124 = scmp.lt.s32.totalorder %s9, 2
    // Predicated region
    $region21: #{tpu_custom_call.1} parent=5 // pred_check
      %p125 = pneg %p124
    $region22: #{tpu_custom_call.1} parent=5 // pred_check_branch
      %127 = sbr.rel (%p125) target = $region24
    $region23: #{tpu_custom_call.1} parent=5 // pred_region
      // Predicated region
      $region25: #{tpu_custom_call.1} parent=23 // pred_check
        %p128 = pneg %p29
      $region26: #{tpu_custom_call.1} parent=23 // pred_check_branch
        %130 = sbr.rel (%p128) target = $region28
      $region27: #{tpu_custom_call.1} parent=23 // pred_region
        %s131 = smul.u32 8, %s9
        %p132 = scmp.lt.s32.totalorder %s131, 15
        %s133 = scalar_select %p132, %s131, 15
        %s134 = smul.addr %s133, 8
        %s135 = scalar_lea.vmem %s0, %s134
        %s136 = smul.u32 8, %s9
      $region28: #{tpu_custom_call.1} parent=23 // pred_fallthru
        _
    $region24: #{tpu_custom_call.1} parent=5 // pred_fallthru
      _
    %p137 = scmp.le.s32.totalorder 1, %s9
    %p138 = scmp.lt.s32.totalorder %s9, 3
    %p139 = pnand %p137, %p138
    %p140 = pneg %p139
    // Predicated region
    $region29: #{tpu_custom_call.1} parent=5 // pred_check
      _
    $region30: #{tpu_custom_call.1} parent=5 // pred_check_branch
      %142 = sbr.rel (%p139) target = $region32
    $region31: #{tpu_custom_call.1} parent=5 // pred_region
      %s143 = ssub.s32 %s9, 1
      %s144 = smul.u32 8, %s14
      %p145 = scmp.lt.s32.totalorder %s144, 15
      %s146 = scalar_select %p145, %s144, 15
      %s147 = smul.addr %s146, 8
      %s148 = scalar_lea.vmem %s0, %s147
      %p149 = pneg %p35
      %p150 = pneg %p32
      %p151 = pneg %p56
      %p152 = pneg %p53
      %p153 = pneg %p77
      %p154 = pneg %p74
      %p155 = pneg %p103
      %p156 = pneg %p100
      %s157 = smul.u32 8, %s14
      %p158 = scmp.lt.s32.totalorder %s157, 15
      %s159 = scalar_select %p158, %s157, 15
      %s160 = smul.addr %s159, 8
      %s161 = scalar_lea.vmem %s3, %s160
      %s162 = smul.u32 8, %s14
      %p163 = scmp.lt.s32.totalorder %s162, 15
      %s164 = scalar_select %p163, %s162, 15
      %s165 = smul.addr %s164, 8
      %s166 = scalar_lea.vmem %s0, %s165
      %s167 = smul.u32 8, %s14
      %s168 = smul.u32 8, %s14
      %p169 = scmp.lt.s32.totalorder %s168, 15
      %s170 = scalar_select %p169, %s168, 15
      %s171 = smul.addr %s170, 8
      %s172 = scalar_lea.vmem %s3, %s171
      %s173 = smul.u32 8, %s14
      %v174 = vld [vmem:[%s166] sm:$0xff]
      %v175 = vld [vmem:[%s166 + $0x8] sm:$0xff]
      %v176 = vld [vmem:[%s166 + $0x10] sm:$0xff]
      %v177 = vld [vmem:[%s166 + $0x18] sm:$0xff]
      %v178 = vld [vmem:[%s166 + $0x20] sm:$0xff]
      %v179 = vld [vmem:[%s166 + $0x28] sm:$0xff]
      %v180 = vld [vmem:[%s166 + $0x30] sm:$0xff]
      %v181 = vld [vmem:[%s166 + $0x38] sm:$0xff]
      %v182 = vld [vmem:[%s1] sm:$0xff]
      %v183 = vld [vmem:[%s2] sm:$0x1]
      %v185 = vlaneseq
      %v186 = vshrl.u32 %v185, 7
      %v187 = vsub.s32 0, %v186
      %v188 = vrot.slane %v183, %v187
      %vm190 = vcmask 64512
      %v192 = vsel %vm190, %v174, 0
      %v195 = vsel %vm190, %v175, 0
      %v198 = vsel %vm190, %v176, 0
      %v201 = vsel %vm190, %v177, 0
      %v204 = vsel %vm190, %v178, 0
      %v207 = vsel %vm190, %v179, 0
      %v210 = vsel %vm190, %v180, 0
      %v213 = vsel %vm190, %v181, 0
      %215 = vmatprep.subr.mxu0 0.0
      %216 = vmatpush1.msra.mxu0 0.0
      %217 = vmatprep.subr.mxu0 0.0
      %218 = vmatpush1.msra.mxu0 0.0
      %219 = vmatprep.subr.mxu0 0.0
      %220 = vmatpush1.msra.mxu0 0.0
      %221 = vmatprep.subr.mxu0 0.0
      %222 = vmatpush1.msra.mxu0 0.0
      %223 = vmatprep.subr.mxu0 0.0
      %224 = vmatpush1.msra.mxu0 0.0
      %225 = vmatprep.subr.mxu0 0.0
      %226 = vmatpush1.msra.mxu0 0.0
      %227 = vmatprep.subr.mxu0 0.0
      %228 = vmatpush1.msra.mxu0 0.0
      %229 = vmatprep.subr.mxu0 0.0
      %230 = vmatpush1.msra.mxu0 0.0
      %231 = vmatprep.subr.mxu0 0.0
      %232 = vmatpush1.msra.mxu0 0.0
      %233 = vmatprep.subr.mxu0 0.0
      %234 = vmatpush1.msra.mxu0 0.0
      %235 = vmatprep.subr.mxu0 0.0
      %236 = vmatpush1.msra.mxu0 0.0
      %237 = vmatprep.subr.mxu0 0.0
      %238 = vmatpush1.msra.mxu0 0.0
      %239 = vmatprep.subr.mxu0 0.0
      %240 = vmatpush1.msra.mxu0 0.0
      %241 = vmatprep.subr.mxu0 0.0
      %242 = vmatpush1.msra.mxu0 0.0
      %243 = vmatprep.subr.mxu0 0.0
      %244 = vmatpush1.msra.mxu0 0.0
      %245 = vmatprep.subr.mxu0 0.0
      %246 = vmatpush1.msra.mxu0 %v182
      %247 = vmatprep.subr.mxu0 0.0
      %248 = vmatpush2.msra.mxu0 0.0
      %249 = vmatprep.subr.mxu0 0.0
      %250 = vmatpush2.msra.mxu0 0.0
      %251 = vmatprep.subr.mxu0 0.0
      %252 = vmatpush2.msra.mxu0 0.0
      %253 = vmatprep.subr.mxu0 0.0
      %254 = vmatpush2.msra.mxu0 0.0
      %255 = vmatprep.subr.mxu0 0.0
      %256 = vmatpush2.msra.mxu0 0.0
      %257 = vmatprep.subr.mxu0 0.0
      %258 = vmatpush2.msra.mxu0 0.0
      %259 = vmatprep.subr.mxu0 0.0
      %260 = vmatpush2.msra.mxu0 0.0
      %261 = vmatprep.subr.mxu0 0.0
      %262 = vmatpush2.msra.mxu0 0.0
      %263 = vmatprep.subr.mxu0 0.0
      %264 = vmatpush2.msra.mxu0 0.0
      %265 = vmatprep.subr.mxu0 0.0
      %266 = vmatpush2.msra.mxu0 0.0
      %267 = vmatprep.subr.mxu0 0.0
      %268 = vmatpush2.msra.mxu0 0.0
      %269 = vmatprep.subr.mxu0 0.0
      %270 = vmatpush2.msra.mxu0 0.0
      %271 = vmatprep.subr.mxu0 0.0
      %272 = vmatpush2.msra.mxu0 0.0
      %273 = vmatprep.subr.mxu0 0.0
      %274 = vmatpush2.msra.mxu0 0.0
      %275 = vmatprep.subr.mxu0 0.0
      %276 = vmatpush2.msra.mxu0 0.0
      %277 = vmatprep.subr.mxu0 0.0
      %278 = vmatpush2.msra.mxu0 0.0
      %279 = vmatprep.mubr.f32.mxu0 0.0
      %280 = vmatmul.mubr.f32.gmra.mxu0 %v192
      %v281 = vpop.f32.mrf.mxu0
      %v282 = vadd.f32 %v188, %v281
      %v283 = vpop.f32.mrf.mxu0
      %284 = vmatprep.mubr.f32.mxu0 0.0
      %285 = vmatmul.mubr.f32.gmra.mxu0 %v195
      %v286 = vpop.f32.mrf.mxu0
      %v287 = vadd.f32 %v188, %v286
      %v288 = vpop.f32.mrf.mxu0
      %289 = vmatprep.mubr.f32.mxu0 0.0
      %290 = vmatmul.mubr.f32.gmra.mxu0 %v198
      %v291 = vpop.f32.mrf.mxu0
      %v292 = vadd.f32 %v188, %v291
      %v293 = vpop.f32.mrf.mxu0
      %294 = vmatprep.mubr.f32.mxu0 0.0
      %295 = vmatmul.mubr.f32.gmra.mxu0 %v201
      %v296 = vpop.f32.mrf.mxu0
      %v297 = vadd.f32 %v188, %v296
      %v298 = vpop.f32.mrf.mxu0
      %299 = vmatprep.mubr.f32.mxu0 0.0
      %300 = vmatmul.mubr.f32.gmra.mxu0 %v204
      %v301 = vpop.f32.mrf.mxu0
      %v302 = vadd.f32 %v188, %v301
      %v303 = vpop.f32.mrf.mxu0
      %304 = vmatprep.mubr.f32.mxu0 0.0
      %305 = vmatmul.mubr.f32.gmra.mxu0 %v207
      %v306 = vpop.f32.mrf.mxu0
      %v307 = vadd.f32 %v188, %v306
      %v308 = vpop.f32.mrf.mxu0
      %309 = vmatprep.mubr.f32.mxu0 0.0
      %310 = vmatmul.mubr.f32.gmra.mxu0 %v210
      %v311 = vpop.f32.mrf.mxu0
      %v312 = vadd.f32 %v188, %v311
      %v313 = vpop.f32.mrf.mxu0
      %314 = vmatprep.mubr.f32.mxu0 0.0
      %315 = vmatmul.mubr.f32.gmra.mxu0 %v213
      %v316 = vpop.f32.mrf.mxu0
      %v317 = vadd.f32 %v188, %v316
      %v318 = vpop.f32.mrf.mxu0
      %319 = vdwg.mxu0
      %v320 = vmax.f32 %v282, 0.0
      %v321 = vmax.f32 %v287, 0.0
      %v322 = vmax.f32 %v292, 0.0
      %v323 = vmax.f32 %v297, 0.0
      %v324 = vmax.f32 %v302, 0.0
      %v325 = vmax.f32 %v307, 0.0
      %v326 = vmax.f32 %v312, 0.0
      %v327 = vmax.f32 %v317, 0.0
      %vm328 = vcmask 130048
      %329 = vst.msk [vmem:[%s172] sm:$0xff] %vm328, %v320
      %330 = vst.msk [vmem:[%s172 + $0x8] sm:$0xff] %vm328, %v321
      %331 = vst.msk [vmem:[%s172 + $0x10] sm:$0xff] %vm328, %v322
      %332 = vst.msk [vmem:[%s172 + $0x18] sm:$0xff] %vm328, %v323
      %333 = vst.msk [vmem:[%s172 + $0x20] sm:$0xff] %vm328, %v324
      %334 = vst.msk [vmem:[%s172 + $0x28] sm:$0xff] %vm328, %v325
      %335 = vst.msk [vmem:[%s172 + $0x30] sm:$0xff] %vm328, %v326
      %336 = vst.msk [vmem:[%s172 + $0x38] sm:$0xff] %vm328, %v327
      %s337 = smul.u32 8, %s14
      %p338 = scmp.lt.s32.totalorder %s337, 15
      %s339 = scalar_select %p338, %s337, 15
      %s340 = smul.addr %s339, 8
      %s341 = scalar_lea.vmem %s3, %s340
      // Predicated region
      $region33: #{tpu_custom_call.1} parent=31 // pred_check
        %p342 = pneg %p100
      $region34: #{tpu_custom_call.1} parent=31 // pred_check_branch
        %344 = sbr.rel (%p342) target = $region36
      $region35: #{tpu_custom_call.1} parent=31 // pred_region
        %s345 = smul.u32 8, %s14
      $region36: #{tpu_custom_call.1} parent=31 // pred_fallthru
        _
    $region32: #{tpu_custom_call.1} parent=5 // pred_fallthru
      _
    %p346 = scmp.le.s32.totalorder 2, %s9
    // Predicated region
    $region37: #{tpu_custom_call.1} parent=5 // pred_check
      %p347 = pneg %p346
    $region38: #{tpu_custom_call.1} parent=5 // pred_check_branch
      %349 = sbr.rel (%p347) target = $region40
    $region39: #{tpu_custom_call.1} parent=5 // pred_region
      %s350 = ssub.s32 %s9, 2
      // Predicated region
      $region41: #{tpu_custom_call.1} parent=39 // pred_check
        %p351 = pneg %p106
      $region42: #{tpu_custom_call.1} parent=39 // pred_check_branch
        %353 = sbr.rel (%p351) target = $region44
      $region43: #{tpu_custom_call.1} parent=39 // pred_region
        %s354 = smul.u32 8, %s15
        %p355 = scmp.lt.s32.totalorder %s354, 15
        %s356 = scalar_select %p355, %s354, 15
        %s357 = smul.addr %s356, 8
        %s358 = scalar_lea.vmem %s3, %s357
      $region44: #{tpu_custom_call.1} parent=39 // pred_fallthru
        _
    $region40: #{tpu_custom_call.1} parent=5 // pred_fallthru
      _
  $region6: #{tpu_custom_call.1} parent=0 // loop_footer
    %s13 = sadd.s32 1, %s9
  $region7: #{tpu_custom_call.1} parent=0 // loop_footer_branch
    %8 = sbr.rel target = $region3
  $region8: #{tpu_custom_call.1} parent=0 // loop_exit
    _

</llo_original>
